<compile_context>
chip_gen: v6e
topology: v6e:2x2x1
jax: 0.10.0
libtpu: 0.0.40
codegen_flags: <defaults>
</compile_context>

<pallas_src>
import functools

import jax
import jax.numpy as jnp
from jax.experimental import pallas as pl
from jax.experimental.pallas import tpu as pltpu


def _round_up(x, m):
    return (x + m - 1) // m * m


def _silu(y):
    # y*sigmoid(y) == y*0.5*(tanh(y/2)+1): single EUP push per element.
    return y * (0.5 * (jnp.tanh(0.5 * y) + 1.0))


# ----------------------------- Pallas kernel --------------------------------
def _bottleneck_kernel(x_ref, w1_ref, b1_ref, w2_ref, b2_ref, mask_ref,
                       o_ref, patch_ref, *, W, C_pad, add):
    """Fused Bottleneck body, channels on sublanes / fused batch*H*W on lanes.

      x_ref     : (C1, cols)          input column block (whole images), f32
      w1_ref    : (C_pad, C1)         cv1 weight, BN1 scale folded, bf16
      b1_ref    : (C_pad, 1)          cv1 folded BN bias, f32
      w2_ref    : (3, C2, 3*C_pad)    cv2 im2col weight per kernel row, bf16
      b2_ref    : (C2, 1)             cv2 folded BN bias, f32
      mask_ref  : (9, cols)           0/1 boundary masks for the 9 taps, f32
      o_ref     : (C2, cols)          output column block, f32
      patch_ref : (2*3*C_pad, cols)   double-buffered per-row im2col slab, bf16
    """
    # ---- cv1: 1x1 conv == channel matmul (bf16 MXU, f32 acc) + bias + SiLU ----
    y1 = jnp.dot(w1_ref[...], x_ref[...].astype(jnp.bfloat16),
                 preferred_element_type=jnp.float32)
    y1 = _silu(y1 + b1_ref[...])                          # (C_pad, cols), f32

    cols = y1.shape[1]
    KG = 3 * C_pad                                        # K per kernel row

    # ---- cv2: 3x3 conv as 3 accumulating K=3*C_pad matmuls (one per row) ----
    # tap (sy, sx) needs y1[c, p + sy*W + sx] with zeros outside the image:
    # an XLU lane rotation plus a precomputed boundary mask; the masks also
    # zero every position where the rotation crossed an image boundary.
    acc = None
    for gi, sy in enumerate((-1, 0, 1)):
        base = (gi % 2) * KG                              # double-buffered slab
        for ti, sx in enumerate((-1, 0, 1)):
            d = sy * W + sx
            if d == 0:
                tap = y1
            else:
                t = gi * 3 + ti
                tap = pltpu.roll(y1, (-d) % cols, 1) * mask_ref[t:t + 1, :]
            patch_ref[base + ti * C_pad: base + (ti + 1) * C_pad, :] = (
                tap.astype(jnp.bfloat16))
        part = jnp.dot(w2_ref[gi], patch_ref[base:base + KG, :],
                       preferred_element_type=jnp.float32)
        acc = part if acc is None else acc + part

    y2 = _silu(acc + b2_ref[...])                         # (C2, cols), f32
    if add:
        y2 = y2 + x_ref[...]                              # re-read x (short live range)
    o_ref[...] = y2.astype(o_ref.dtype)


def _bottleneck_pallas(x_flat, w1_mat, b1, w2_3, b2, tap_mask, *,
                       W, C_pad, add, cols_blk, n_blocks):
    C1, total_cols = x_flat.shape
    C2 = w2_3.shape[1]
    kernel = functools.partial(_bottleneck_kernel, W=W, C_pad=C_pad, add=add)

    # Rough VMEM estimate (double-buffered I/O blocks + scratch + constants);
    # raise the scoped limit only when the default 32 MiB would be exceeded,
    # capped at v7x's 64 MiB physical VMEM.
    vmem_est = (2 * (C1 + C2) * cols_blk * 4
                + 6 * C_pad * cols_blk * 2
                + w1_mat.size * 2 + w2_3.size * 2
                + (b1.size + b2.size) * 4 + tap_mask.size * 4)
    params = dict(dimension_semantics=("parallel",))
    if vmem_est > 24 * 1024 * 1024:
        params["vmem_limit_bytes"] = int(min(2 * vmem_est, 64 * 1024 * 1024))

    return pl.pallas_call(
        kernel,
        out_shape=jax.ShapeDtypeStruct((C2, total_cols), x_flat.dtype),
        grid=(n_blocks,),
        in_specs=[
            pl.BlockSpec((C1, cols_blk),       lambda j: (0, j)),       # x
            pl.BlockSpec((C_pad, C1),          lambda j: (0, 0)),       # w1 (BN folded)
            pl.BlockSpec((C_pad, 1),           lambda j: (0, 0)),       # b1
            pl.BlockSpec((3, C2, 3 * C_pad),   lambda j: (0, 0, 0)),    # w2 im2col per row
            pl.BlockSpec((C2, 1),              lambda j: (0, 0)),       # b2
            pl.BlockSpec((9, cols_blk),        lambda j: (0, 0)),       # tap masks
        ],
        out_specs=pl.BlockSpec((C2, cols_blk), lambda j: (0, j)),
        scratch_shapes=[pltpu.VMEM((2 * 3 * C_pad, cols_blk), jnp.bfloat16)],
        compiler_params=pltpu.CompilerParams(**params),
    )(x_flat, w1_mat, b1, w2_3, b2, tap_mask)


# ------------------------------- wrapper -------------------------------------
def _fold_bn(w_oihw, bn, eps):
    """Fold eval-mode BN scale into the conv weight (rounded to bf16 for the
    MXU) and return the remaining f32 bias."""
    g, b, m, v = bn
    s = g / jnp.sqrt(v + eps)
    w_folded = (w_oihw * s[:, None, None, None]).astype(jnp.bfloat16)
    bias = (b - m * s).astype(jnp.float32)
    return w_folded, bias


def _pick_images_per_block(N, HW, target_cols):
    divs = [d for d in range(1, N + 1) if N % d == 0 and d * HW <= target_cols]
    if not divs:
        return 1
    ipb = max(divs)
    if N // ipb < 2:
        # keep >= 2 grid steps so both v7x TensorCores get work
        two_step = [d for d in divs if N // d >= 2]
        if two_step:
            ipb = max(two_step)
    return ipb


def bottleneck_forward(x_nchw, w1_oihw, bn1, w2_oihw, bn2, *,
                       shortcut=True, eps=1e-5, target_cols=2048):
    """YOLOv5 Bottleneck forward (eval-mode BN), NCHW in / NCHW out."""
    N, C1, H, W = x_nchw.shape
    C_ = w1_oihw.shape[0]
    C2 = w2_oihw.shape[0]
    HW = H * W
    add = bool(shortcut) and (C1 == C2)
    C_pad = _round_up(C_, 16)          # bf16 sublane packing: (16,128) tiles

    w1f, b1 = _fold_bn(w1_oihw, bn1, eps)      # (C_, C1, 1, 1) bf16, (C_,) f32
    w2f, b2 = _fold_bn(w2_oihw, bn2, eps)      # (C2, C_, 3, 3) bf16, (C2,) f32

    # cv1 weight padded to C_pad output rows (padded channels stay exactly 0).
    w1_mat = jnp.zeros((C_pad, C1), jnp.bfloat16).at[:C_, :].set(w1f[:, :, 0, 0])
    b1_col = jnp.zeros((C_pad, 1), jnp.float32).at[:C_, :].set(b1[:, None])

    # cv2 im2col weight: one slab per kernel row ky, column index = kx*C_pad + c
    # (zero columns for the padded channels).
    w2_pad = jnp.zeros((C2, C_pad, 3, 3), jnp.bfloat16).at[:, :C_, :, :].set(w2f)
    w2_3 = jnp.transpose(w2_pad, (2, 0, 3, 1)).reshape(3, C2, 3 * C_pad)
    b2_col = b2[:, None]                                              # (C2, 1)

    # Fuse batch into the lane axis: (C1, N*HW), lane-dense.
    x_flat = jnp.transpose(x_nchw, (1, 0, 2, 3)).reshape(C1, N * HW)
    x_flat = x_flat.astype(jnp.float32)

    ipb = _pick_images_per_block(N, HW, target_cols)
    if (ipb * HW) % 128 != 0:
        ipb = N                        # single full-width block (block == array dim)
    cols_blk = ipb * HW
    n_blocks = N // ipb

    # 0/1 validity masks of the 9 taps in flattened-spatial (lane) coordinates,
    # tiled across the images of one column block.  They zero both true image
    # borders and any roll wrap/bleed across image boundaries within a block.
    h_idx = jnp.arange(HW, dtype=jnp.int32) // W
    w_idx = jnp.arange(HW, dtype=jnp.int32) % W
    rows = []
    for sy in (-1, 0, 1):
        for sx in (-1, 0, 1):
            ok = ((h_idx + sy >= 0) & (h_idx + sy < H) &
                  (w_idx + sx >= 0) & (w_idx + sx < W))
            rows.append(ok)
    tap_mask = jnp.tile(jnp.stack(rows, 0).astype(jnp.float32), (1, ipb))

    # TODO(synk): for very large feature maps (cols_blk beyond VMEM even at
    # ipb=1), add a spatial (H) tiling grid axis with a one-row halo so the
    # +/-W taps stay correct at interior tile boundaries (v7x: 64 MiB VMEM).
    out_flat = _bottleneck_pallas(x_flat, w1_mat, b1_col, w2_3, b2_col, tap_mask,
                                  W=W, C_pad=C_pad, add=add,
                                  cols_blk=cols_blk, n_blocks=n_blocks)
    return jnp.transpose(out_flat.reshape(C2, N, H, W), (1, 0, 2, 3))


# ---------------- pure-JAX reference (correctness check) --------------------
def bottleneck_ref(x_nchw, w1_oihw, bn1, w2_oihw, bn2, *,
                   shortcut=True, eps=1e-5):
    """Reference using the same BN-folded, bf16-rounded conv weights the kernel
    feeds the MXU (so only activation rounding drift remains), computed with
    HIGHEST-precision convs."""
    w1f, b1 = _fold_bn(w1_oihw, bn1, eps)
    w2f, b2 = _fold_bn(w2_oihw, bn2, eps)

    def conv(x, w, pad):
        return jax.lax.conv_general_dilated(
            x, w.astype(jnp.float32), (1, 1),
            [(pad, pad), (pad, pad)],
            dimension_numbers=('NCHW', 'OIHW', 'NCHW'),
            precision=jax.lax.Precision.HIGHEST)

    def silu(z):
        return z * jax.nn.sigmoid(z)

    y1 = silu(conv(x_nchw, w1f, 0) + b1[None, :, None, None])
    y2 = silu(conv(y1, w2f, 1) + b2[None, :, None, None])
    add = bool(shortcut) and (x_nchw.shape[1] == w2_oihw.shape[0])
    return x_nchw + y2 if add else y2


if __name__ == "__main__":
    # Bottleneck(c1=8, c2=8, shortcut=True, g=1, e=0.5) -> c_ = 4
    N, C1, H, W = 2, 8, 16, 16
    C2, e = 8, 0.5
    C_ = int(C2 * e)
    shortcut = True

    key = jax.random.PRNGKey(0)
    ks = jax.random.split(key, 11)

    # Input in PyTorch NCHW convention.
    x = jax.random.normal(ks[0], (N, C1, H, W), jnp.float32)

    # Conv weights (bias=False), PyTorch OIHW layout.
    w1 = 0.2 * jax.random.normal(ks[1], (C_, C1, 1, 1), jnp.float32)
    w2 = 0.2 * jax.random.normal(ks[2], (C2, C_, 3, 3), jnp.float32)

    # BatchNorm (eval-mode): (gamma, beta, running_mean, running_var)
    bn1 = (1.0 + 0.1 * jax.random.normal(ks[3], (C_,), jnp.float32),
           0.1 * jax.random.normal(ks[4], (C_,), jnp.float32),
           0.1 * jax.random.normal(ks[5], (C_,), jnp.float32),
           jnp.abs(jax.random.normal(ks[6], (C_,), jnp.float32)) + 0.5)
    bn2 = (1.0 + 0.1 * jax.random.normal(ks[7], (C2,), jnp.float32),
           0.1 * jax.random.normal(ks[8], (C2,), jnp.float32),
           0.1 * jax.random.normal(ks[9], (C2,), jnp.float32),
           jnp.abs(jax.random.normal(ks[10], (C2,), jnp.float32)) + 0.5)

    out = bottleneck_forward(x, w1, bn1, w2, bn2, shortcut=shortcut)
    out = jax.block_until_ready(out)

    ref = bottleneck_ref(x, w1, bn1, w2, bn2, shortcut=shortcut)
    assert out.shape == (N, C2, H, W)
    max_err = float(jnp.max(jnp.abs(out - ref)))
    # bf16 MXU operands (x / y1 taps) leave ~1e-2 worst-case drift vs the
    # weight-matched f32 reference.
    assert jnp.allclose(out, ref, atol=3e-2, rtol=3e-2), max_err

    print("KERNEL_OK")
</pallas_src>

<mosaic_0001>
module attributes {stable_mosaic.version = 11 : i64} {
  func.func @_bottleneck_kernel(%arg0: i32, %arg1: memref<8x256xf32, #tpu.memory_space<vmem>>, %arg2: memref<16x8xbf16, #tpu.memory_space<vmem>>, %arg3: memref<16x1xf32, #tpu.memory_space<vmem>>, %arg4: memref<3x8x48xbf16, #tpu.memory_space<vmem>>, %arg5: memref<8x1xf32, #tpu.memory_space<vmem>>, %arg6: memref<9x256xf32, #tpu.memory_space<vmem>>, %arg7: memref<8x256xf32, #tpu.memory_space<vmem>>, %arg8: memref<96x256xbf16, #tpu.memory_space<vmem>>) attributes {dimension_semantics = [#tpu.dimension_semantics<parallel>], iteration_bounds = array<i64: 2>, scalar_prefetch = 0 : i64, scratch_operands = 1 : i64, tpu.core_type = #tpu.core_type<tc>, window_params = [{transform_indices = @transform_0, window_bounds = array<i64: 8, 256>}, {pipeline_mode = #tpu.pipeline_mode<synchronous>, transform_indices = @transform_1, window_bounds = array<i64: 16, 8>}, {pipeline_mode = #tpu.pipeline_mode<synchronous>, transform_indices = @transform_2, window_bounds = array<i64: 16, 1>}, {pipeline_mode = #tpu.pipeline_mode<synchronous>, transform_indices = @transform_3, window_bounds = array<i64: 3, 8, 48>}, {pipeline_mode = #tpu.pipeline_mode<synchronous>, transform_indices = @transform_4, window_bounds = array<i64: 8, 1>}, {pipeline_mode = #tpu.pipeline_mode<synchronous>, transform_indices = @transform_5, window_bounds = array<i64: 9, 256>}, {transform_indices = @transform_6, window_bounds = array<i64: 8, 256>}]} {
    %c0 = arith.constant 0 : index
    %c0_0 = arith.constant 0 : index
    %0 = vector.load %arg2[%c0, %c0_0] : memref<16x8xbf16, #tpu.memory_space<vmem>>, vector<16x8xbf16>
    %c0_1 = arith.constant 0 : index
    %c0_2 = arith.constant 0 : index
    %1 = vector.load %arg1[%c0_1, %c0_2] : memref<8x256xf32, #tpu.memory_space<vmem>>, vector<8x256xf32>
    %2 = arith.truncf %1 : vector<8x256xf32> to vector<8x256xbf16>
    %cst = arith.constant dense<0.000000e+00> : vector<16x256xf32>
    %3 = tpu.matmul %0, %2, %cst {dimension_numbers = #tpu.dot_dimension_numbers<[1], [0], [0], [1], [0, 0, 1, 1], [], []>} : vector<16x8xbf16>, vector<8x256xbf16>, vector<16x256xf32> -> vector<16x256xf32>
    %c0_3 = arith.constant 0 : index
    %c0_4 = arith.constant 0 : index
    %4 = vector.load %arg3[%c0_3, %c0_4] : memref<16x1xf32, #tpu.memory_space<vmem>>, vector<16x1xf32>
    %5 = vector.broadcast %4 : vector<16x1xf32> to vector<16x256xf32>
    %6 = arith.addf %3, %5 : vector<16x256xf32>
    %cst_5 = arith.constant 5.000000e-01 : f32
    %7 = vector.broadcast %cst_5 : f32 to vector<16x256xf32>
    %8 = arith.mulf %7, %6 : vector<16x256xf32>
    %9 = math.tanh %8 : vector<16x256xf32>
    %cst_6 = arith.constant 1.000000e+00 : f32
    %10 = vector.broadcast %cst_6 : f32 to vector<16x256xf32>
    %11 = arith.addf %9, %10 : vector<16x256xf32>
    %cst_7 = arith.constant 5.000000e-01 : f32
    %12 = vector.broadcast %cst_7 : f32 to vector<16x256xf32>
    %13 = arith.mulf %12, %11 : vector<16x256xf32>
    %14 = arith.mulf %6, %13 : vector<16x256xf32>
    %c17_i32 = arith.constant 17 : i32
    %15 = tpu.dynamic_rotate %14 by %c17_i32 dim 1 : vector<16x256xf32>, i32 -> vector<16x256xf32>
    %c0_8 = arith.constant 0 : index
    %c0_9 = arith.constant 0 : index
    %16 = vector.load %arg6[%c0_8, %c0_9] : memref<9x256xf32, #tpu.memory_space<vmem>>, vector<1x256xf32>
    %17 = vector.broadcast %16 : vector<1x256xf32> to vector<16x256xf32>
    %18 = arith.mulf %15, %17 : vector<16x256xf32>
    %19 = arith.truncf %18 : vector<16x256xf32> to vector<16x256xbf16>
    %c0_10 = arith.constant 0 : index
    %c0_11 = arith.constant 0 : index
    %20 = vector.load %arg8[%c0_10, %c0_11] : memref<96x256xbf16, #tpu.memory_space<vmem>>, vector<16x256xbf16>
    tpu.vector_store %arg8[%c0_10, %c0_11], %19 {strides = array<i32>} : memref<96x256xbf16, #tpu.memory_space<vmem>>, vector<16x256xbf16>,
    %c16_i32 = arith.constant 16 : i32
    %21 = tpu.dynamic_rotate %14 by %c16_i32 dim 1 : vector<16x256xf32>, i32 -> vector<16x256xf32>
    %c1 = arith.constant 1 : index
    %c0_12 = arith.constant 0 : index
    %22 = vector.load %arg6[%c1, %c0_12] : memref<9x256xf32, #tpu.memory_space<vmem>>, vector<1x256xf32>
    %23 = vector.broadcast %22 : vector<1x256xf32> to vector<16x256xf32>
    %24 = arith.mulf %21, %23 : vector<16x256xf32>
    %25 = arith.truncf %24 : vector<16x256xf32> to vector<16x256xbf16>
    %c16 = arith.constant 16 : index
    %c0_13 = arith.constant 0 : index
    %26 = vector.load %arg8[%c16, %c0_13] : memref<96x256xbf16, #tpu.memory_space<vmem>>, vector<16x256xbf16>
    tpu.vector_store %arg8[%c16, %c0_13], %25 {strides = array<i32>} : memref<96x256xbf16, #tpu.memory_space<vmem>>, vector<16x256xbf16>,
    %c15_i32 = arith.constant 15 : i32
    %27 = tpu.dynamic_rotate %14 by %c15_i32 dim 1 : vector<16x256xf32>, i32 -> vector<16x256xf32>
    %c2 = arith.constant 2 : index
    %c0_14 = arith.constant 0 : index
    %28 = vector.load %arg6[%c2, %c0_14] : memref<9x256xf32, #tpu.memory_space<vmem>>, vector<1x256xf32>
    %29 = vector.broadcast %28 : vector<1x256xf32> to vector<16x256xf32>
    %30 = arith.mulf %27, %29 : vector<16x256xf32>
    %31 = arith.truncf %30 : vector<16x256xf32> to vector<16x256xbf16>
    %c32 = arith.constant 32 : index
    %c0_15 = arith.constant 0 : index
    %32 = vector.load %arg8[%c32, %c0_15] : memref<96x256xbf16, #tpu.memory_space<vmem>>, vector<16x256xbf16>
    tpu.vector_store %arg8[%c32, %c0_15], %31 {strides = array<i32>} : memref<96x256xbf16, #tpu.memory_space<vmem>>, vector<16x256xbf16>,
    %c0_16 = arith.constant 0 : index
    %c0_17 = arith.constant 0 : index
    %c0_18 = arith.constant 0 : index
    %33 = vector.load %arg4[%c0_16, %c0_17, %c0_18] : memref<3x8x48xbf16, #tpu.memory_space<vmem>>, vector<1x8x48xbf16>
    %34 = vector.shape_cast %33 : vector<1x8x48xbf16> to vector<8x48xbf16>
    %c0_19 = arith.constant 0 : index
    %c0_20 = arith.constant 0 : index
    %35 = vector.load %arg8[%c0_19, %c0_20] : memref<96x256xbf16, #tpu.memory_space<vmem>>, vector<48x256xbf16>
    %cst_21 = arith.constant dense<0.000000e+00> : vector<8x256xf32>
    %36 = tpu.matmul %34, %35, %cst_21 {dimension_numbers = #tpu.dot_dimension_numbers<[1], [0], [0], [1], [0, 0, 1, 1], [], []>} : vector<8x48xbf16>, vector<48x256xbf16>, vector<8x256xf32> -> vector<8x256xf32>
    %c1_i32 = arith.constant 1 : i32
    %37 = tpu.dynamic_rotate %14 by %c1_i32 dim 1 : vector<16x256xf32>, i32 -> vector<16x256xf32>
    %c3 = arith.constant 3 : index
    %c0_22 = arith.constant 0 : index
    %38 = vector.load %arg6[%c3, %c0_22] : memref<9x256xf32, #tpu.memory_space<vmem>>, vector<1x256xf32>
    %39 = vector.broadcast %38 : vector<1x256xf32> to vector<16x256xf32>
    %40 = arith.mulf %37, %39 : vector<16x256xf32>
    %41 = arith.truncf %40 : vector<16x256xf32> to vector<16x256xbf16>
    %c48 = arith.constant 48 : index
    %c0_23 = arith.constant 0 : index
    %42 = vector.load %arg8[%c48, %c0_23] : memref<96x256xbf16, #tpu.memory_space<vmem>>, vector<16x256xbf16>
    tpu.vector_store %arg8[%c48, %c0_23], %41 {strides = array<i32>} : memref<96x256xbf16, #tpu.memory_space<vmem>>, vector<16x256xbf16>,
    %43 = arith.truncf %14 : vector<16x256xf32> to vector<16x256xbf16>
    %c64 = arith.constant 64 : index
    %c0_24 = arith.constant 0 : index
    %44 = vector.load %arg8[%c64, %c0_24] : memref<96x256xbf16, #tpu.memory_space<vmem>>, vector<16x256xbf16>
    tpu.vector_store %arg8[%c64, %c0_24], %43 {strides = array<i32>} : memref<96x256xbf16, #tpu.memory_space<vmem>>, vector<16x256xbf16>,
    %c255_i32 = arith.constant 255 : i32
    %45 = tpu.dynamic_rotate %14 by %c255_i32 dim 1 : vector<16x256xf32>, i32 -> vector<16x256xf32>
    %c5 = arith.constant 5 : index
    %c0_25 = arith.constant 0 : index
    %46 = vector.load %arg6[%c5, %c0_25] : memref<9x256xf32, #tpu.memory_space<vmem>>, vector<1x256xf32>
    %47 = vector.broadcast %46 : vector<1x256xf32> to vector<16x256xf32>
    %48 = arith.mulf %45, %47 : vector<16x256xf32>
    %49 = arith.truncf %48 : vector<16x256xf32> to vector<16x256xbf16>
    %c80 = arith.constant 80 : index
    %c0_26 = arith.constant 0 : index
    %50 = vector.load %arg8[%c80, %c0_26] : memref<96x256xbf16, #tpu.memory_space<vmem>>, vector<16x256xbf16>
    tpu.vector_store %arg8[%c80, %c0_26], %49 {strides = array<i32>} : memref<96x256xbf16, #tpu.memory_space<vmem>>, vector<16x256xbf16>,
    %c1_27 = arith.constant 1 : index
    %c0_28 = arith.constant 0 : index
    %c0_29 = arith.constant 0 : index
    %51 = vector.load %arg4[%c1_27, %c0_28, %c0_29] : memref<3x8x48xbf16, #tpu.memory_space<vmem>>, vector<1x8x48xbf16>
    %52 = vector.shape_cast %51 : vector<1x8x48xbf16> to vector<8x48xbf16>
    %c48_30 = arith.constant 48 : index
    %c0_31 = arith.constant 0 : index
    %53 = vector.load %arg8[%c48_30, %c0_31] : memref<96x256xbf16, #tpu.memory_space<vmem>>, vector<48x256xbf16>
    %cst_32 = arith.constant dense<0.000000e+00> : vector<8x256xf32>
    %54 = tpu.matmul %52, %53, %cst_32 {dimension_numbers = #tpu.dot_dimension_numbers<[1], [0], [0], [1], [0, 0, 1, 1], [], []>} : vector<8x48xbf16>, vector<48x256xbf16>, vector<8x256xf32> -> vector<8x256xf32>
    %55 = arith.addf %36, %54 : vector<8x256xf32>
    %c241_i32 = arith.constant 241 : i32
    %56 = tpu.dynamic_rotate %14 by %c241_i32 dim 1 : vector<16x256xf32>, i32 -> vector<16x256xf32>
    %c6 = arith.constant 6 : index
    %c0_33 = arith.constant 0 : index
    %57 = vector.load %arg6[%c6, %c0_33] : memref<9x256xf32, #tpu.memory_space<vmem>>, vector<1x256xf32>
    %58 = vector.broadcast %57 : vector<1x256xf32> to vector<16x256xf32>
    %59 = arith.mulf %56, %58 : vector<16x256xf32>
    %60 = arith.truncf %59 : vector<16x256xf32> to vector<16x256xbf16>
    %c0_34 = arith.constant 0 : index
    %c0_35 = arith.constant 0 : index
    %61 = vector.load %arg8[%c0_34, %c0_35] : memref<96x256xbf16, #tpu.memory_space<vmem>>, vector<16x256xbf16>
    tpu.vector_store %arg8[%c0_34, %c0_35], %60 {strides = array<i32>} : memref<96x256xbf16, #tpu.memory_space<vmem>>, vector<16x256xbf16>,
    %c240_i32 = arith.constant 240 : i32
    %62 = tpu.dynamic_rotate %14 by %c240_i32 dim 1 : vector<16x256xf32>, i32 -> vector<16x256xf32>
    %c7 = arith.constant 7 : index
    %c0_36 = arith.constant 0 : index
    %63 = vector.load %arg6[%c7, %c0_36] : memref<9x256xf32, #tpu.memory_space<vmem>>, vector<1x256xf32>
    %64 = vector.broadcast %63 : vector<1x256xf32> to vector<16x256xf32>
    %65 = arith.mulf %62, %64 : vector<16x256xf32>
    %66 = arith.truncf %65 : vector<16x256xf32> to vector<16x256xbf16>
    %c16_37 = arith.constant 16 : index
    %c0_38 = arith.constant 0 : index
    %67 = vector.load %arg8[%c16_37, %c0_38] : memref<96x256xbf16, #tpu.memory_space<vmem>>, vector<16x256xbf16>
    tpu.vector_store %arg8[%c16_37, %c0_38], %66 {strides = array<i32>} : memref<96x256xbf16, #tpu.memory_space<vmem>>, vector<16x256xbf16>,
    %c239_i32 = arith.constant 239 : i32
    %68 = tpu.dynamic_rotate %14 by %c239_i32 dim 1 : vector<16x256xf32>, i32 -> vector<16x256xf32>
    %c8 = arith.constant 8 : index
    %c0_39 = arith.constant 0 : index
    %69 = vector.load %arg6[%c8, %c0_39] : memref<9x256xf32, #tpu.memory_space<vmem>>, vector<1x256xf32>
    %70 = vector.broadcast %69 : vector<1x256xf32> to vector<16x256xf32>
    %71 = arith.mulf %68, %70 : vector<16x256xf32>
    %72 = arith.truncf %71 : vector<16x256xf32> to vector<16x256xbf16>
    %c32_40 = arith.constant 32 : index
    %c0_41 = arith.constant 0 : index
    %73 = vector.load %arg8[%c32_40, %c0_41] : memref<96x256xbf16, #tpu.memory_space<vmem>>, vector<16x256xbf16>
    tpu.vector_store %arg8[%c32_40, %c0_41], %72 {strides = array<i32>} : memref<96x256xbf16, #tpu.memory_space<vmem>>, vector<16x256xbf16>,
    %c2_42 = arith.constant 2 : index
    %c0_43 = arith.constant 0 : index
    %c0_44 = arith.constant 0 : index
    %74 = vector.load %arg4[%c2_42, %c0_43, %c0_44] : memref<3x8x48xbf16, #tpu.memory_space<vmem>>, vector<1x8x48xbf16>
    %75 = vector.shape_cast %74 : vector<1x8x48xbf16> to vector<8x48xbf16>
    %c0_45 = arith.constant 0 : index
    %c0_46 = arith.constant 0 : index
    %76 = vector.load %arg8[%c0_45, %c0_46] : memref<96x256xbf16, #tpu.memory_space<vmem>>, vector<48x256xbf16>
    %cst_47 = arith.constant dense<0.000000e+00> : vector<8x256xf32>
    %77 = tpu.matmul %75, %76, %cst_47 {dimension_numbers = #tpu.dot_dimension_numbers<[1], [0], [0], [1], [0, 0, 1, 1], [], []>} : vector<8x48xbf16>, vector<48x256xbf16>, vector<8x256xf32> -> vector<8x256xf32>
    %78 = arith.addf %55, %77 : vector<8x256xf32>
    %c0_48 = arith.constant 0 : index
    %c0_49 = arith.constant 0 : index
    %79 = vector.load %arg5[%c0_48, %c0_49] : memref<8x1xf32, #tpu.memory_space<vmem>>, vector<8x1xf32>
    %80 = vector.broadcast %79 : vector<8x1xf32> to vector<8x256xf32>
    %81 = arith.addf %78, %80 : vector<8x256xf32>
    %cst_50 = arith.constant 5.000000e-01 : f32
    %82 = vector.broadcast %cst_50 : f32 to vector<8x256xf32>
    %83 = arith.mulf %82, %81 : vector<8x256xf32>
    %84 = math.tanh %83 : vector<8x256xf32>
    %cst_51 = arith.constant 1.000000e+00 : f32
    %85 = vector.broadcast %cst_51 : f32 to vector<8x256xf32>
    %86 = arith.addf %84, %85 : vector<8x256xf32>
    %cst_52 = arith.constant 5.000000e-01 : f32
    %87 = vector.broadcast %cst_52 : f32 to vector<8x256xf32>
    %88 = arith.mulf %87, %86 : vector<8x256xf32>
    %89 = arith.mulf %81, %88 : vector<8x256xf32>
    %c0_53 = arith.constant 0 : index
    %c0_54 = arith.constant 0 : index
    %90 = vector.load %arg1[%c0_53, %c0_54] : memref<8x256xf32, #tpu.memory_space<vmem>>, vector<8x256xf32>
    %91 = arith.addf %89, %90 : vector<8x256xf32>
    %c0_55 = arith.constant 0 : index
    %c0_56 = arith.constant 0 : index
    %92 = vector.load %arg7[%c0_55, %c0_56] : memref<8x256xf32, #tpu.memory_space<vmem>>, vector<8x256xf32>
    tpu.vector_store %arg7[%c0_55, %c0_56], %91 {strides = array<i32>} : memref<8x256xf32, #tpu.memory_space<vmem>>, vector<8x256xf32>,
    return
  }
  func.func @transform_0(%arg0: i32) -> (i32, i32) {
    %c0_i32 = arith.constant 0 : i32
    %c0_i32_0 = arith.constant 0 : i32
    return %c0_i32, %arg0 : i32, i32
  }
  func.func @transform_1(%arg0: i32) -> (i32, i32) {
    %c0_i32 = arith.constant 0 : i32
    %c0_i32_0 = arith.constant 0 : i32
    %c0_i32_1 = arith.constant 0 : i32
    return %c0_i32, %c0_i32_0 : i32, i32
  }
  func.func @transform_2(%arg0: i32) -> (i32, i32) {
    %c0_i32 = arith.constant 0 : i32
    %c0_i32_0 = arith.constant 0 : i32
    %c0_i32_1 = arith.constant 0 : i32
    return %c0_i32, %c0_i32_0 : i32, i32
  }
  func.func @transform_3(%arg0: i32) -> (i32, i32, i32) {
    %c0_i32 = arith.constant 0 : i32
    %c0_i32_0 = arith.constant 0 : i32
    %c0_i32_1 = arith.constant 0 : i32
    %c0_i32_2 = arith.constant 0 : i32
    return %c0_i32, %c0_i32_0, %c0_i32_1 : i32, i32, i32
  }
  func.func @transform_4(%arg0: i32) -> (i32, i32) {
    %c0_i32 = arith.constant 0 : i32
    %c0_i32_0 = arith.constant 0 : i32
    %c0_i32_1 = arith.constant 0 : i32
    return %c0_i32, %c0_i32_0 : i32, i32
  }
  func.func @transform_5(%arg0: i32) -> (i32, i32) {
    %c0_i32 = arith.constant 0 : i32
    %c0_i32_0 = arith.constant 0 : i32
    %c0_i32_1 = arith.constant 0 : i32
    return %c0_i32, %c0_i32_0 : i32, i32
  }
  func.func @transform_6(%arg0: i32) -> (i32, i32) {
    %c0_i32 = arith.constant 0 : i32
    %c0_i32_0 = arith.constant 0 : i32
    return %c0_i32, %arg0 : i32, i32
  }
}

</mosaic_0001>

<llo_original>
// kernel: tpu_custom_call.1
$region0: #{tpu_custom_call.1}
  #allocation0 [shape = 'u32[]', space=smem, size = 0x4, offset = 0x4, fixed_abs, tag = 'smem constant byte address 0x4 - core index']
  #allocation1 [shape = 'u32[144,128]{1,0:T(1,128)}', space=vmem, size = 0x12000, scoped, tag = 'internal scratch']
  #allocation2 [shape = 'bf16[96,256]{1,0:T(8,128)(2,1)}', space=vmem, size = 0xc000, scoped, tag = 'scratch operand']
  %s0 = inlined_call_operand.vmem [shape: f32[8,512], index: 0, kind: input, shape index: {}]
  %s1 = inlined_call_operand.vmem [shape: bf16[16,8], index: 1, kind: input, shape index: {}]
  %s2 = inlined_call_operand.vmem [shape: f32[16,1], index: 2, kind: input, shape index: {}]
  %s3 = inlined_call_operand.hbm [shape: bf16[3,8,48], index: 3, kind: input, shape index: {}]
  %s4 = inlined_call_operand.vmem [shape: f32[8,1], index: 4, kind: input, shape index: {}]
  %s5 = inlined_call_operand.hbm [shape: f32[9,256], index: 5, kind: input, shape index: {}]
  %s6 = inlined_call_operand.hbm [shape: f32[8,512], index: 6, kind: output, shape index: {}]
  %s7 = sld [smem:[#allocation0]]
  $region65: #{tpu_custom_call.1} parent=0
    _
  %s9 = ssub.s32 1, %s7
  %s10 = scalar_select 0, %s9, %s7
  $region1: #{tpu_custom_call.1} parent=0
    #allocation3 [shape = 'u8[6144]{0}', space=vmem, size = 0x1800, scoped, tag = 'input window, operand 3, single buffered']
    #allocation4 [shape = 's32[2]{0}', space=sflag, size = 0x8, scoped, tag = 'scoped memory for tpu_custom_call.1']
    #allocation5 [shape = 's32[2]{0}', space=sflag, size = 0x8, scoped, tag = 'scoped memory for tpu_custom_call.1']
    #allocation6 [shape = 'u8[16384]{0}', space=vmem, size = 0x4000, scoped, tag = 'input window, operand 5, single buffered']
    #allocation7 [shape = 's32[1]{0}', space=sflag, size = 0x4, scoped, tag = 'scoped memory for tpu_custom_call.1']
    #allocation8 [shape = 'u8[16384]{0}', space=vmem, size = 0x4000, scoped, tag = 'output window, operand 0']
    %11 = vsyncpa [#allocation4], 0
    %12 = vsyncpa [#allocation7], 0
    %13 = vsyncpa [#allocation5], 0
    %s14 = scalar_lea.sflag [#allocation5], 1
    %15 = vsyncpa %s14, 0
    loop: start=0, step=1, limit=4
    $region2: #{tpu_custom_call.1} parent=1 // loop_pre_header
      _
    $region3: #{tpu_custom_call.1} parent=1 // loop_header
      %s17 = sphi 0, %s21
      %p18 = scmp.ge.s32.totalorder %s17, 4
      %s27 = sphi 0, %s29
      %s30 = sphi 0, %s27
      %s31 = sphi 0, %s30
      %s47 = sphi 0, %s31
      %s51 = sphi 0, %s51
      %s53 = sphi 0, %s51
      %s54 = sphi 0, %s53
      %s68 = sphi 0, %s54
      %s72 = sphi 0, %s72
      %s74 = sphi 0, %s72
      %s75 = sphi 0, %s74
      %s89 = sphi 0, %s75
      %s93 = sphi 0, %s93
      %s95 = sphi 0, %s93
      %s96 = sphi 0, %s95
      %s110 = sphi 0, %s96
      %s114 = sphi 0, %s114
      %s116 = sphi 0, %s114
      %s117 = sphi 0, %s116
      %s131 = sphi 0, %s117
      %s135 = sphi 0, %s135
      %s137 = sphi 0, %s135
      %s138 = sphi 0, %s137
      %s152 = sphi 0, %s138
      %s158 = sphi 0, %s160
      %s161 = sphi 0, %s158
      %s162 = sphi 0, %s161
      %s178 = sphi 0, %s162
    $region4: #{tpu_custom_call.1} parent=1 // loop_header_branch
      %20 = sbr.rel (%p18) target = $region8
    $region5: #{tpu_custom_call.1} parent=1 // loop_body
      %s22 = ssub.s32 %s17, 1
      %s23 = ssub.s32 %s17, 2
      %s24 = sadd.s32 %s17, 1
      %s25 = ssub.s32 %s17, %s24
      %p26 = scmp.eq.s32.totalorder %s25, 0
      %s28 = sadd.s32 %s27, 1
      %s29 = scalar_select %p26, %s27, %s28
      %p32 = pneg %p26
      %p33 = scmp.eq.s32.totalorder %s17, 1
      %p34 = por %p32, %p33
      %p35 = scmp.ne.s32.totalorder %s27, %s30
      %p36 = scmp.eq.s32.totalorder %s17, 0
      %p37 = por %p35, %p36
      %p38 = scmp.ne.s32.totalorder %s27, %s30
      %p39 = scmp.eq.s32.totalorder %s22, 1
      %p40 = por %p38, %p39
      %p41 = scmp.ne.s32.totalorder %s30, %s31
      %p42 = scmp.eq.s32.totalorder %s22, 0
      %p43 = por %p41, %p42
      %p44 = scmp.ne.s32.totalorder %s30, %s31
      %p45 = scmp.eq.s32.totalorder %s23, 1
      %p46 = por %p44, %p45
      %p48 = scmp.ne.s32.totalorder %s31, %s47
      %p49 = scmp.eq.s32.totalorder %s23, 0
      %p50 = por %p48, %p49
      %s52 = sadd.s32 %s51, 1
      %p55 = scmp.eq.s32.totalorder %s17, 1
      %p56 = scmp.ne.s32.totalorder %s51, %s53
      %p57 = scmp.eq.s32.totalorder %s17, 0
      %p58 = por %p56, %p57
      %p59 = scmp.ne.s32.totalorder %s51, %s53
      %p60 = scmp.eq.s32.totalorder %s22, 1
      %p61 = por %p59, %p60
      %p62 = scmp.ne.s32.totalorder %s53, %s54
      %p63 = scmp.eq.s32.totalorder %s22, 0
      %p64 = por %p62, %p63
      %p65 = scmp.ne.s32.totalorder %s53, %s54
      %p66 = scmp.eq.s32.totalorder %s23, 1
      %p67 = por %p65, %p66
      %p69 = scmp.ne.s32.totalorder %s54, %s68
      %p70 = scmp.eq.s32.totalorder %s23, 0
      %p71 = por %p69, %p70
      %s73 = sadd.s32 %s72, 1
      %p76 = scmp.eq.s32.totalorder %s17, 1
      %p77 = scmp.ne.s32.totalorder %s72, %s74
      %p78 = scmp.eq.s32.totalorder %s17, 0
      %p79 = por %p77, %p78
      %p80 = scmp.ne.s32.totalorder %s72, %s74
      %p81 = scmp.eq.s32.totalorder %s22, 1
      %p82 = por %p80, %p81
      %p83 = scmp.ne.s32.totalorder %s74, %s75
      %p84 = scmp.eq.s32.totalorder %s22, 0
      %p85 = por %p83, %p84
      %p86 = scmp.ne.s32.totalorder %s74, %s75
      %p87 = scmp.eq.s32.totalorder %s23, 1
      %p88 = por %p86, %p87
      %p90 = scmp.ne.s32.totalorder %s75, %s89
      %p91 = scmp.eq.s32.totalorder %s23, 0
      %p92 = por %p90, %p91
      %s94 = sadd.s32 %s93, 1
      %p97 = scmp.eq.s32.totalorder %s17, 1
      %p98 = scmp.ne.s32.totalorder %s93, %s95
      %p99 = scmp.eq.s32.totalorder %s17, 0
      %p100 = por %p98, %p99
      %p101 = scmp.ne.s32.totalorder %s93, %s95
      %p102 = scmp.eq.s32.totalorder %s22, 1
      %p103 = por %p101, %p102
      %p104 = scmp.ne.s32.totalorder %s95, %s96
      %p105 = scmp.eq.s32.totalorder %s22, 0
      %p106 = por %p104, %p105
      %p107 = scmp.ne.s32.totalorder %s95, %s96
      %p108 = scmp.eq.s32.totalorder %s23, 1
      %p109 = por %p107, %p108
      %p111 = scmp.ne.s32.totalorder %s96, %s110
      %p112 = scmp.eq.s32.totalorder %s23, 0
      %p113 = por %p111, %p112
      %s115 = sadd.s32 %s114, 1
      %p118 = scmp.eq.s32.totalorder %s17, 1
      %p119 = scmp.ne.s32.totalorder %s114, %s116
      %p120 = scmp.eq.s32.totalorder %s17, 0
      %p121 = por %p119, %p120
      %p122 = scmp.ne.s32.totalorder %s114, %s116
      %p123 = scmp.eq.s32.totalorder %s22, 1
      %p124 = por %p122, %p123
      %p125 = scmp.ne.s32.totalorder %s116, %s117
      %p126 = scmp.eq.s32.totalorder %s22, 0
      %p127 = por %p125, %p126
      %p128 = scmp.ne.s32.totalorder %s116, %s117
      %p129 = scmp.eq.s32.totalorder %s23, 1
      %p130 = por %p128, %p129
      %p132 = scmp.ne.s32.totalorder %s117, %s131
      %p133 = scmp.eq.s32.totalorder %s23, 0
      %p134 = por %p132, %p133
      %s136 = sadd.s32 %s135, 1
      %p139 = scmp.eq.s32.totalorder %s17, 1
      %p140 = scmp.ne.s32.totalorder %s135, %s137
      %p141 = scmp.eq.s32.totalorder %s17, 0
      %p142 = por %p140, %p141
      %p143 = scmp.ne.s32.totalorder %s135, %s137
      %p144 = scmp.eq.s32.totalorder %s22, 1
      %p145 = por %p143, %p144
      %p146 = scmp.ne.s32.totalorder %s137, %s138
      %p147 = scmp.eq.s32.totalorder %s22, 0
      %p148 = por %p146, %p147
      %p149 = scmp.ne.s32.totalorder %s137, %s138
      %p150 = scmp.eq.s32.totalorder %s23, 1
      %p151 = por %p149, %p150
      %p153 = scmp.ne.s32.totalorder %s138, %s152
      %p154 = scmp.eq.s32.totalorder %s23, 0
      %p155 = por %p153, %p154
      %s156 = ssub.s32 %s17, %s24
      %p157 = scmp.eq.s32.totalorder %s156, 0
      %s159 = sadd.s32 %s158, 1
      %s160 = scalar_select %p157, %s158, %s159
      %p163 = pneg %p157
      %p164 = scmp.eq.s32.totalorder %s17, 1
      %p165 = por %p163, %p164
      %p166 = scmp.ne.s32.totalorder %s158, %s161
      %p167 = scmp.eq.s32.totalorder %s17, 0
      %p168 = por %p166, %p167
      %p169 = scmp.ne.s32.totalorder %s158, %s161
      %p170 = scmp.eq.s32.totalorder %s22, 1
      %p171 = por %p169, %p170
      %p172 = scmp.ne.s32.totalorder %s161, %s162
      %p173 = scmp.eq.s32.totalorder %s22, 0
      %p174 = por %p172, %p173
      %p175 = scmp.ne.s32.totalorder %s161, %s162
      %p176 = scmp.eq.s32.totalorder %s23, 1
      %p177 = por %p175, %p176
      %p179 = scmp.ne.s32.totalorder %s162, %s178
      %p180 = scmp.eq.s32.totalorder %s23, 0
      %p181 = por %p179, %p180
      %p182 = scmp.le.s32.totalorder 1, %s17
      %p183 = scmp.lt.s32.totalorder %s17, 3
      %p184 = pnand %p182, %p183
      %p185 = pneg %p184
      // Predicated region
      $region9: #{tpu_custom_call.1} parent=5 // pred_check
        _
      $region10: #{tpu_custom_call.1} parent=5 // pred_check_branch
        %187 = sbr.rel (%p184) target = $region12
      $region11: #{tpu_custom_call.1} parent=5 // pred_region
        %s188 = ssub.s32 %s17, 1
        // Predicated region
        $region13: #{tpu_custom_call.1} parent=11 // pred_check
          %p189 = pneg %p64
        $region14: #{tpu_custom_call.1} parent=11 // pred_check_branch
          %191 = sbr.rel (%p189) target = $region16
        $region15: #{tpu_custom_call.1} parent=11 // pred_region
          _
        $region16: #{tpu_custom_call.1} parent=11 // pred_fallthru
          _
        // Predicated region
        $region17: #{tpu_custom_call.1} parent=11 // pred_check
          %p192 = pneg %p85
        $region18: #{tpu_custom_call.1} parent=11 // pred_check_branch
          %194 = sbr.rel (%p192) target = $region20
        $region19: #{tpu_custom_call.1} parent=11 // pred_region
          _
        $region20: #{tpu_custom_call.1} parent=11 // pred_fallthru
          _
        // Predicated region
        $region21: #{tpu_custom_call.1} parent=11 // pred_check
          %p195 = pneg %p106
        $region22: #{tpu_custom_call.1} parent=11 // pred_check_branch
          %197 = sbr.rel (%p195) target = $region24
        $region23: #{tpu_custom_call.1} parent=11 // pred_region
          %s199 = ssub.s32 192, 192
          %200 = vsyncadd [#allocation4], %s199
          %s201 = sshll.u32 [#allocation3], 4
          %s202 = int_to_ptr.vmem [resolvable:$true] %s201
          %207 = dma.hbm_to_vmem [thread:$0]  %s3, 192, %s202, [#allocation4], 64, 64, 4
        $region24: #{tpu_custom_call.1} parent=11 // pred_fallthru
          _
        // Predicated region
        $region25: #{tpu_custom_call.1} parent=11 // pred_check
          %p208 = pneg %p127
        $region26: #{tpu_custom_call.1} parent=11 // pred_check_branch
          %210 = sbr.rel (%p208) target = $region28
        $region27: #{tpu_custom_call.1} parent=11 // pred_region
          _
        $region28: #{tpu_custom_call.1} parent=11 // pred_fallthru
          _
        // Predicated region
        $region29: #{tpu_custom_call.1} parent=11 // pred_check
          %p211 = pneg %p148
        $region30: #{tpu_custom_call.1} parent=11 // pred_check_branch
          %213 = sbr.rel (%p211) target = $region32
        $region31: #{tpu_custom_call.1} parent=11 // pred_region
          %s215 = ssub.s32 512, 512
          %216 = vsyncadd [#allocation7], %s215
          %s217 = sshll.u32 [#allocation6], 4
          %s218 = int_to_ptr.vmem [resolvable:$true] %s217
          %223 = dma.hbm_to_vmem [thread:$0]  %s5, 512, %s218, [#allocation7], 256, 256, 16
        $region32: #{tpu_custom_call.1} parent=11 // pred_fallthru
          _
      $region12: #{tpu_custom_call.1} parent=5 // pred_fallthru
        _
      %p224 = scmp.lt.s32.totalorder %s17, 2
      // Predicated region
      $region33: #{tpu_custom_call.1} parent=5 // pred_check
        %p225 = pneg %p224
      $region34: #{tpu_custom_call.1} parent=5 // pred_check_branch
        %227 = sbr.rel (%p225) target = $region36
      $region35: #{tpu_custom_call.1} parent=5 // pred_region
        // Predicated region
        $region37: #{tpu_custom_call.1} parent=35 // pred_check
          %p228 = pneg %p37
        $region38: #{tpu_custom_call.1} parent=35 // pred_check_branch
          %230 = sbr.rel (%p228) target = $region40
        $region39: #{tpu_custom_call.1} parent=35 // pred_region
          %s231 = smul.u32 2, %s17
          %p232 = scmp.lt.s32.totalorder %s231, 3
          %s233 = scalar_select %p232, %s231, 3
          %s234 = smul.addr %s233, 8
          %s235 = scalar_lea.vmem %s0, %s234
          %s236 = smul.u32 2, %s17
        $region40: #{tpu_custom_call.1} parent=35 // pred_fallthru
          _
      $region36: #{tpu_custom_call.1} parent=5 // pred_fallthru
        _
      %p237 = scmp.le.s32.totalorder 1, %s17
      %p238 = scmp.lt.s32.totalorder %s17, 3
      %p239 = pnand %p237, %p238
      %p240 = pneg %p239
      // Predicated region
      $region41: #{tpu_custom_call.1} parent=5 // pred_check
        _
      $region42: #{tpu_custom_call.1} parent=5 // pred_check_branch
        %242 = sbr.rel (%p239) target = $region44
      $region43: #{tpu_custom_call.1} parent=5 // pred_region
        %s243 = ssub.s32 %s17, 1
        // Predicated region
        $region45: #{tpu_custom_call.1} parent=43 // pred_check
          %p244 = pneg %p106
        $region46: #{tpu_custom_call.1} parent=43 // pred_check_branch
          %246 = sbr.rel (%p244) target = $region48
        $region47: #{tpu_custom_call.1} parent=43 // pred_region
          %247 = dma.done [#allocation4], 192
        $region48: #{tpu_custom_call.1} parent=43 // pred_fallthru
          _
        // Predicated region
        $region49: #{tpu_custom_call.1} parent=43 // pred_check
          %p248 = pneg %p148
        $region50: #{tpu_custom_call.1} parent=43 // pred_check_branch
          %250 = sbr.rel (%p248) target = $region52
        $region51: #{tpu_custom_call.1} parent=43 // pred_region
          %251 = dma.done [#allocation7], 512
        $region52: #{tpu_custom_call.1} parent=43 // pred_fallthru
          _
        %s252 = smul.u32 2, %s22
        %p253 = scmp.lt.s32.totalorder %s252, 3
        %s254 = scalar_select %p253, %s252, 3
        %s255 = smul.addr %s254, 8
        %s256 = scalar_lea.vmem %s0, %s255
        %p257 = pneg %p43
        %p258 = pneg %p40
        %p259 = pneg %p64
        %p260 = pneg %p61
        %p261 = pneg %p85
        %p262 = pneg %p82
        %p263 = pneg %p106
        %p264 = pneg %p103
        %p265 = pneg %p127
        %p266 = pneg %p124
        %p267 = pneg %p148
        %p268 = pneg %p145
        %p269 = pneg %p174
        %p270 = pneg %p171
        %s271 = sand.u32 %s161, 1
        %s272 = scalar_lea.sflag [#allocation5], %s271
        %s273 = sand.u32 %s161, 1
        %s274 = smul.addr %s273, 16
        %s275 = scalar_lea.vmem [#allocation8], %s274
        %s276 = smul.u32 2, %s22
        %p277 = scmp.lt.s32.totalorder %s276, 3
        %s278 = scalar_select %p277, %s276, 3
        %s279 = smul.addr %s278, 8
        %s280 = scalar_lea.vmem %s0, %s279
        %s281 = smul.u32 2, %s22
        %s282 = smul.u32 2, %s22
        %v284 = vld [vmem:[%s1] sm:$0xf]
        %v285 = vld [vmem:[%s1 + $0x4] sm:$0xf]
        %v286 = vld [vmem:[%s280] sm:$0xff]
        %v287 = vld [vmem:[%s280 + $0x8] sm:$0xff]
        %v288 = vpack.c.bf16 %v286, %v286
        %v289 = vpack.c.bf16 %v287, %v287
        %v290 = vld [vmem:[%s2] sm:$0xff]
        %v291 = vld [vmem:[%s2 + $0x8] sm:$0xff]
        %293 = vset.pattern.permute.xlu0 0
        %294 = vperm.xlu0 %293, %v290
        %v295 = vpop.permute.xlu0 %294
        %298 = vset.pattern.permute.xlu0 0
        %299 = vperm.xlu0 %298, %v291
        %v300 = vpop.permute.xlu0 %299
        %v304 = vunpack.c.l.b16 %v284
        %v305 = vunpack.c.l.b16 %v285
        %v306 = vpack.c.b16 %v305, %v304
        %vm307 = vcmask 64512
        %v309 = vsel %vm307, %v306, 0
        %vm311 = vcmask 1043456
        %v313 = vsel %vm311, %v288, 0
        %v316 = vsel %vm311, %v289, 0
        %318 = vmatprep.subr.bf16.mxu0 0
        %319 = vmatpush1.bf16.msra.mxu0 0
        %320 = vmatprep.subr.bf16.mxu0 0
        %321 = vmatpush1.bf16.msra.mxu0 0
        %322 = vmatprep.subr.bf16.mxu0 0
        %323 = vmatpush1.bf16.msra.mxu0 0
        %324 = vmatprep.subr.bf16.mxu0 0
        %325 = vmatpush1.bf16.msra.mxu0 0
        %326 = vmatprep.subr.bf16.mxu0 0
        %327 = vmatpush1.bf16.msra.mxu0 0
        %328 = vmatprep.subr.bf16.mxu0 0
        %329 = vmatpush1.bf16.msra.mxu0 0
        %330 = vmatprep.subr.bf16.mxu0 0
        %331 = vmatpush1.bf16.msra.mxu0 0
        %332 = vmatprep.subr.bf16.mxu0 %v316
        %333 = vmatpush1.bf16.msra.mxu0 %v313
        %334 = vmatprep.subr.bf16.mxu0 0
        %335 = vmatpush2.bf16.msra.mxu0 0
        %336 = vmatprep.subr.bf16.mxu0 0
        %337 = vmatpush2.bf16.msra.mxu0 0
        %338 = vmatprep.subr.bf16.mxu0 0
        %339 = vmatpush2.bf16.msra.mxu0 0
        %340 = vmatprep.subr.bf16.mxu0 0
        %341 = vmatpush2.bf16.msra.mxu0 0
        %342 = vmatprep.subr.bf16.mxu0 0
        %343 = vmatpush2.bf16.msra.mxu0 0
        %344 = vmatprep.subr.bf16.mxu0 0
        %345 = vmatpush2.bf16.msra.mxu0 0
        %346 = vmatprep.subr.bf16.mxu0 0
        %347 = vmatpush2.bf16.msra.mxu0 0
        %348 = vmatprep.subr.bf16.mxu0 0
        %349 = vmatpush2.bf16.msra.mxu0 0
        %350 = vmatprep.mubr.bf16.mxu0 0
        %351 = vmatmul.mubr.bf16.gmra.mxu0 %v309
        %v352 = vpop.f32.mrf.mxu0
        %v353 = vadd.f32 %v295, %v352
        %v354 = vpop.f32.mrf.mxu0
        %v355 = vadd.f32 %v295, %v354
        %v356 = vpop.f32.mrf.mxu0
        %v357 = vadd.f32 %v300, %v356
        %v358 = vpop.f32.mrf.mxu0
        %v359 = vadd.f32 %v300, %v358
        %360 = vdwg.mxu0
        %v361 = vmul.f32 %v353, 0.5
        %v362 = vmul.f32 %v355, 0.5
        %v363 = vmul.f32 %v357, 0.5
        %v364 = vmul.f32 %v359, 0.5
        %v365 = vtanh.pop %v361
        %v366 = vtanh.pop %v362
        %v367 = vtanh.pop %v363
        %v368 = vtanh.pop %v364
        %v369 = vadd.f32 %v365, 1.0
        %v370 = vadd.f32 %v366, 1.0
        %v371 = vadd.f32 %v367, 1.0
        %v372 = vadd.f32 %v368, 1.0
        %v373 = vmul.f32 %v369, 0.5
        %v374 = vmul.f32 %v370, 0.5
        %v375 = vmul.f32 %v371, 0.5
        %v376 = vmul.f32 %v372, 0.5
        %v377 = vmul.f32 %v353, %v373
        %v378 = vmul.f32 %v355, %v374
        %v379 = vmul.f32 %v357, %v375
        %v380 = vmul.f32 %v359, %v376
        %381 = vrot.lane.b32.xlu0 %v377, 17
        %v382 = vpop.permute.xlu0 %381
        %383 = vrot.lane.b32.xlu0 %v379, 17
        %v384 = vpop.permute.xlu0 %383
        %385 = vrot.lane.b32.xlu0 %v378, 17
        %v386 = vpop.permute.xlu0 %385
        %387 = vrot.lane.b32.xlu0 %v380, 17
        %v388 = vpop.permute.xlu0 %387
        %v389 = vlaneseq
        %v390 = vand.u32 %v389, 127
        %vm391 = vcmp.lt.s32.totalorder %v390, 17
        %v392 = vsel %vm391, %v382, %v386
        %v393 = vsel %vm391, %v384, %v388
        %v394 = vsel %vm391, %v386, %v382
        %v395 = vsel %vm391, %v388, %v384
        %v396 = vld [vmem:[#allocation6] ss:$8 sm:$0x3]
        %v398 = vlaneseq
        %v399 = vshrl.u32 %v398, 7
        %v400 = vsub.s32 0, %v399
        %v401 = vrot.slane %v396, %v400
        %v402 = vlaneseq
        %v403 = vshrl.u32 %v402, 7
        %v404 = vsub.s32 1, %v403
        %v405 = vrot.slane %v396, %v404
        %v408 = vmul.f32 %v394, %v401
        %v409 = vmul.f32 %v392, %v405
        %v410 = vmul.f32 %v395, %v401
        %v411 = vmul.f32 %v393, %v405
        %v412 = vpack.c.bf16 %v410, %v408
        %v413 = vpack.c.bf16 %v411, %v409
        %v416 = vunpack.c.l.b16 %v412
        %v417 = vunpack.c.l.b16 %v413
        %v418 = vunpack.c.h.b16 %v412
        %v419 = vunpack.c.h.b16 %v413
        %v420 = vpack.c.b16 %v417, %v416
        %v421 = vpack.c.b16 %v419, %v418
        %424 = vst [vmem:[#allocation2] sm:$0xff] %v420
        %425 = vst [vmem:[#allocation2 + $0x8] sm:$0xff] %v421
        %426 = vrot.lane.b32.xlu0 %v377, 16
        %v427 = vpop.permute.xlu0 %426
        %428 = vrot.lane.b32.xlu0 %v379, 16
        %v429 = vpop.permute.xlu0 %428
        %430 = vrot.lane.b32.xlu0 %v378, 16
        %v431 = vpop.permute.xlu0 %430
        %432 = vrot.lane.b32.xlu0 %v380, 16
        %v433 = vpop.permute.xlu0 %432
        %vm434 = vcmp.lt.s32.totalorder %v390, 16
        %v435 = vsel %vm434, %v427, %v431
        %v436 = vsel %vm434, %v429, %v433
        %v437 = vsel %vm434, %v431, %v427
        %v438 = vsel %vm434, %v433, %v429
        %s439 = scalar_lea.vmem [#allocation6], 1
        %v440 = vld [vmem:[%s439] ss:$8 sm:$0x3]
        %v442 = vlaneseq
        %v443 = vshrl.u32 %v442, 7
        %v444 = vsub.s32 0, %v443
        %v445 = vrot.slane %v440, %v444
        %v446 = vlaneseq
        %v447 = vshrl.u32 %v446, 7
        %v448 = vsub.s32 1, %v447
        %v449 = vrot.slane %v440, %v448
        %v452 = vmul.f32 %v437, %v445
        %v453 = vmul.f32 %v435, %v449
        %v454 = vmul.f32 %v438, %v445
        %v455 = vmul.f32 %v436, %v449
        %v456 = vpack.c.bf16 %v454, %v452
        %v457 = vpack.c.bf16 %v455, %v453
        %v460 = vunpack.c.l.b16 %v456
        %v461 = vunpack.c.l.b16 %v457
        %v462 = vunpack.c.h.b16 %v456
        %v463 = vunpack.c.h.b16 %v457
        %v464 = vpack.c.b16 %v461, %v460
        %v465 = vpack.c.b16 %v463, %v462
        %468 = vst [vmem:[#allocation2 + $0x10] sm:$0xff] %v464
        %469 = vst [vmem:[#allocation2 + $0x18] sm:$0xff] %v465
        %470 = vrot.lane.b32.xlu0 %v377, 15
        %v471 = vpop.permute.xlu0 %470
        %472 = vrot.lane.b32.xlu0 %v379, 15
        %v473 = vpop.permute.xlu0 %472
        %474 = vrot.lane.b32.xlu0 %v378, 15
        %v475 = vpop.permute.xlu0 %474
        %476 = vrot.lane.b32.xlu0 %v380, 15
        %v477 = vpop.permute.xlu0 %476
        %vm478 = vcmp.lt.s32.totalorder %v390, 15
        %v479 = vsel %vm478, %v471, %v475
        %v480 = vsel %vm478, %v473, %v477
        %v481 = vsel %vm478, %v475, %v471
        %v482 = vsel %vm478, %v477, %v473
        %s483 = scalar_lea.vmem [#allocation6], 2
        %v484 = vld [vmem:[%s483] ss:$8 sm:$0x3]
        %v486 = vlaneseq
        %v487 = vshrl.u32 %v486, 7
        %v488 = vsub.s32 0, %v487
        %v489 = vrot.slane %v484, %v488
        %v490 = vlaneseq
        %v491 = vshrl.u32 %v490, 7
        %v492 = vsub.s32 1, %v491
        %v493 = vrot.slane %v484, %v492
        %v496 = vmul.f32 %v481, %v489
        %v497 = vmul.f32 %v479, %v493
        %v498 = vmul.f32 %v482, %v489
        %v499 = vmul.f32 %v480, %v493
        %v500 = vpack.c.bf16 %v498, %v496
        %v501 = vpack.c.bf16 %v499, %v497
        %v504 = vunpack.c.l.b16 %v500
        %v505 = vunpack.c.l.b16 %v501
        %v506 = vunpack.c.h.b16 %v500
        %v507 = vunpack.c.h.b16 %v501
        %v508 = vpack.c.b16 %v505, %v504
        %v509 = vpack.c.b16 %v507, %v506
        %512 = vst [vmem:[#allocation2 + $0x20] sm:$0xff] %v508
        %513 = vst [vmem:[#allocation2 + $0x28] sm:$0xff] %v509
        %v514 = vld [vmem:[#allocation3] sm:$0xf]
        %v515 = vld [vmem:[#allocation2] sm:$0xff]
        %v516 = vld [vmem:[#allocation2 + $0x8] sm:$0xff]
        %v517 = vld [vmem:[#allocation2 + $0x10] sm:$0xff]
        %v518 = vld [vmem:[#allocation2 + $0x18] sm:$0xff]
        %v519 = vld [vmem:[#allocation2 + $0x20] sm:$0xff]
        %v520 = vld [vmem:[#allocation2 + $0x28] sm:$0xff]
        %521 = vrot.lane.b32.xlu0 %v377, 1
        %v522 = vpop.permute.xlu0 %521
        %523 = vrot.lane.b32.xlu0 %v379, 1
        %v524 = vpop.permute.xlu0 %523
        %525 = vrot.lane.b32.xlu0 %v378, 1
        %v526 = vpop.permute.xlu0 %525
        %527 = vrot.lane.b32.xlu0 %v380, 1
        %v528 = vpop.permute.xlu0 %527
        %vm529 = vcmp.lt.s32.totalorder %v390, 1
        %v530 = vsel %vm529, %v522, %v526
        %v531 = vsel %vm529, %v524, %v528
        %v532 = vsel %vm529, %v526, %v522
        %v533 = vsel %vm529, %v528, %v524
        %s534 = scalar_lea.vmem [#allocation6], 3
        %v535 = vld [vmem:[%s534] ss:$8 sm:$0x3]
        %v537 = vlaneseq
        %v538 = vshrl.u32 %v537, 7
        %v539 = vsub.s32 0, %v538
        %v540 = vrot.slane %v535, %v539
        %v541 = vlaneseq
        %v542 = vshrl.u32 %v541, 7
        %v543 = vsub.s32 1, %v542
        %v544 = vrot.slane %v535, %v543
        %v547 = vmul.f32 %v532, %v540
        %v548 = vmul.f32 %v530, %v544
        %v549 = vmul.f32 %v533, %v540
        %v550 = vmul.f32 %v531, %v544
        %v551 = vpack.c.bf16 %v549, %v547
        %v552 = vpack.c.bf16 %v550, %v548
        %v555 = vunpack.c.l.b16 %v551
        %v556 = vunpack.c.l.b16 %v552
        %v557 = vunpack.c.h.b16 %v551
        %v558 = vunpack.c.h.b16 %v552
        %v559 = vpack.c.b16 %v556, %v555
        %v560 = vpack.c.b16 %v558, %v557
        %563 = vst [vmem:[#allocation2 + $0x30] sm:$0xff] %v559
        %564 = vst [vmem:[#allocation2 + $0x38] sm:$0xff] %v560
        %v565 = vpack.c.bf16 %v379, %v377
        %v566 = vpack.c.bf16 %v380, %v378
        %v569 = vunpack.c.l.b16 %v565
        %v570 = vunpack.c.l.b16 %v566
        %v571 = vunpack.c.h.b16 %v565
        %v572 = vunpack.c.h.b16 %v566
        %v573 = vpack.c.b16 %v570, %v569
        %v574 = vpack.c.b16 %v572, %v571
        %577 = vst [vmem:[#allocation2 + $0x40] sm:$0xff] %v573
        %578 = vst [vmem:[#allocation2 + $0x48] sm:$0xff] %v574
        %579 = vrot.lane.b32.xlu0 %v377, 127
        %v580 = vpop.permute.xlu0 %579
        %581 = vrot.lane.b32.xlu0 %v379, 127
        %v582 = vpop.permute.xlu0 %581
        %583 = vrot.lane.b32.xlu0 %v378, 127
        %v584 = vpop.permute.xlu0 %583
        %585 = vrot.lane.b32.xlu0 %v380, 127
        %v586 = vpop.permute.xlu0 %585
        %vm587 = vcmp.lt.s32.totalorder %v390, 127
        %v588 = vsel %vm587, %v580, %v584
        %v589 = vsel %vm587, %v582, %v586
        %v590 = vsel %vm587, %v584, %v580
        %v591 = vsel %vm587, %v586, %v582
        %s592 = scalar_lea.vmem [#allocation6], 5
        %v593 = vld [vmem:[%s592] ss:$8 sm:$0x3]
        %v595 = vlaneseq
        %v596 = vshrl.u32 %v595, 7
        %v597 = vsub.s32 0, %v596
        %v598 = vrot.slane %v593, %v597
        %v599 = vlaneseq
        %v600 = vshrl.u32 %v599, 7
        %v601 = vsub.s32 1, %v600
        %v602 = vrot.slane %v593, %v601
        %v605 = vmul.f32 %v588, %v598
        %v606 = vmul.f32 %v590, %v602
        %v607 = vmul.f32 %v589, %v598
        %v608 = vmul.f32 %v591, %v602
        %v609 = vpack.c.bf16 %v607, %v605
        %v610 = vpack.c.bf16 %v608, %v606
        %v613 = vunpack.c.l.b16 %v609
        %v614 = vunpack.c.l.b16 %v610
        %v615 = vunpack.c.h.b16 %v609
        %v616 = vunpack.c.h.b16 %v610
        %v617 = vpack.c.b16 %v614, %v613
        %v618 = vpack.c.b16 %v616, %v615
        %621 = vst [vmem:[#allocation2 + $0x50] sm:$0xff] %v617
        %622 = vst [vmem:[#allocation2 + $0x58] sm:$0xff] %v618
        %s623 = scalar_lea.vmem [#allocation3], 4
        %v624 = vld [vmem:[%s623] sm:$0xf]
        %v625 = vld [vmem:[#allocation2 + $0x30] sm:$0xff]
        %v626 = vld [vmem:[#allocation2 + $0x38] sm:$0xff]
        %v627 = vld [vmem:[#allocation2 + $0x40] sm:$0xff]
        %v628 = vld [vmem:[#allocation2 + $0x48] sm:$0xff]
        %v629 = vld [vmem:[#allocation2 + $0x50] sm:$0xff]
        %v630 = vld [vmem:[#allocation2 + $0x58] sm:$0xff]
        %v637 = vunpack.c.l.b16 %v625
        %v638 = vunpack.c.h.b16 %v625
        %v639 = vunpack.c.l.b16 %v626
        %v640 = vunpack.c.h.b16 %v626
        %v641 = vunpack.c.l.b16 %v627
        %v642 = vunpack.c.h.b16 %v627
        %v643 = vunpack.c.l.b16 %v628
        %v644 = vunpack.c.h.b16 %v628
        %v645 = vunpack.c.l.b16 %v629
        %v646 = vunpack.c.h.b16 %v629
        %v647 = vunpack.c.l.b16 %v630
        %v648 = vunpack.c.h.b16 %v630
        %v649 = vpack.c.b16 %v639, %v637
        %v650 = vpack.c.b16 %v640, %v638
        %v651 = vpack.c.b16 %v643, %v641
        %v652 = vpack.c.b16 %v644, %v642
        %v653 = vpack.c.b16 %v647, %v645
        %v654 = vpack.c.b16 %v648, %v646
        %vm661 = vcmask 392192
        %v663 = vsel %vm661, %v624, 0
        %665 = vmatprep.subr.bf16.mxu0 0
        %666 = vmatpush1.bf16.msra.mxu0 0
        %667 = vmatprep.subr.bf16.mxu0 0
        %668 = vmatpush1.bf16.msra.mxu0 0
        %669 = vmatprep.subr.bf16.mxu0 0
        %670 = vmatpush1.bf16.msra.mxu0 0
        %671 = vmatprep.subr.bf16.mxu0 0
        %672 = vmatpush1.bf16.msra.mxu0 0
        %673 = vmatprep.subr.bf16.mxu0 0
        %674 = vmatpush1.bf16.msra.mxu0 0
        %675 = vmatprep.subr.bf16.mxu0 %v654
        %676 = vmatpush1.bf16.msra.mxu0 %v653
        %677 = vmatprep.subr.bf16.mxu0 %v652
        %678 = vmatpush1.bf16.msra.mxu0 %v651
        %679 = vmatprep.subr.bf16.mxu0 %v650
        %680 = vmatpush1.bf16.msra.mxu0 %v649
        %681 = vmatprep.subr.bf16.mxu0 0
        %682 = vmatpush2.bf16.msra.mxu0 0
        %683 = vmatprep.subr.bf16.mxu0 0
        %684 = vmatpush2.bf16.msra.mxu0 0
        %685 = vmatprep.subr.bf16.mxu0 0
        %686 = vmatpush2.bf16.msra.mxu0 0
        %687 = vmatprep.subr.bf16.mxu0 0
        %688 = vmatpush2.bf16.msra.mxu0 0
        %689 = vmatprep.subr.bf16.mxu0 0
        %690 = vmatpush2.bf16.msra.mxu0 0
        %691 = vmatprep.subr.bf16.mxu0 0
        %692 = vmatpush2.bf16.msra.mxu0 0
        %693 = vmatprep.subr.bf16.mxu0 0
        %694 = vmatpush2.bf16.msra.mxu0 0
        %695 = vmatprep.subr.bf16.mxu0 0
        %696 = vmatpush2.bf16.msra.mxu0 0
        %697 = vmatprep.mubr.bf16.mxu0 0
        %698 = vmatmul.mubr.bf16.gmra.mxu0 %v663
        %v699 = vpop.f32.mrf.mxu0
        %v700 = vadd.f32 0.0, %v699
        %v701 = vpop.f32.mrf.mxu0
        %v702 = vadd.f32 0.0, %v701
        %v703 = vpop.f32.mrf.mxu0
        %v704 = vpop.f32.mrf.mxu0
        %705 = vdwg.mxu0
        %v712 = vunpack.c.l.b16 %v515
        %v713 = vunpack.c.h.b16 %v515
        %v714 = vunpack.c.l.b16 %v516
        %v715 = vunpack.c.h.b16 %v516
        %v716 = vunpack.c.l.b16 %v517
        %v717 = vunpack.c.h.b16 %v517
        %v718 = vunpack.c.l.b16 %v518
        %v719 = vunpack.c.h.b16 %v518
        %v720 = vunpack.c.l.b16 %v519
        %v721 = vunpack.c.h.b16 %v519
        %v722 = vunpack.c.l.b16 %v520
        %v723 = vunpack.c.h.b16 %v520
        %v724 = vpack.c.b16 %v714, %v712
        %v725 = vpack.c.b16 %v715, %v713
        %v726 = vpack.c.b16 %v718, %v716
        %v727 = vpack.c.b16 %v719, %v717
        %v728 = vpack.c.b16 %v722, %v720
        %v729 = vpack.c.b16 %v723, %v721
        %v737 = vsel %vm661, %v514, 0
        %739 = vmatprep.subr.bf16.mxu0 0
        %740 = vmatpush1.bf16.msra.mxu0 0
        %741 = vmatprep.subr.bf16.mxu0 0
        %742 = vmatpush1.bf16.msra.mxu0 0
        %743 = vmatprep.subr.bf16.mxu0 0
        %744 = vmatpush1.bf16.msra.mxu0 0
        %745 = vmatprep.subr.bf16.mxu0 0
        %746 = vmatpush1.bf16.msra.mxu0 0
        %747 = vmatprep.subr.bf16.mxu0 0
        %748 = vmatpush1.bf16.msra.mxu0 0
        %749 = vmatprep.subr.bf16.mxu0 %v729
        %750 = vmatpush1.bf16.msra.mxu0 %v728
        %751 = vmatprep.subr.bf16.mxu0 %v727
        %752 = vmatpush1.bf16.msra.mxu0 %v726
        %753 = vmatprep.subr.bf16.mxu0 %v725
        %754 = vmatpush1.bf16.msra.mxu0 %v724
        %755 = vmatprep.subr.bf16.mxu0 0
        %756 = vmatpush2.bf16.msra.mxu0 0
        %757 = vmatprep.subr.bf16.mxu0 0
        %758 = vmatpush2.bf16.msra.mxu0 0
        %759 = vmatprep.subr.bf16.mxu0 0
        %760 = vmatpush2.bf16.msra.mxu0 0
        %761 = vmatprep.subr.bf16.mxu0 0
        %762 = vmatpush2.bf16.msra.mxu0 0
        %763 = vmatprep.subr.bf16.mxu0 0
        %764 = vmatpush2.bf16.msra.mxu0 0
        %765 = vmatprep.subr.bf16.mxu0 0
        %766 = vmatpush2.bf16.msra.mxu0 0
        %767 = vmatprep.subr.bf16.mxu0 0
        %768 = vmatpush2.bf16.msra.mxu0 0
        %769 = vmatprep.subr.bf16.mxu0 0
        %770 = vmatpush2.bf16.msra.mxu0 0
        %771 = vmatprep.mubr.bf16.mxu0 0
        %772 = vmatmul.mubr.bf16.gmra.mxu0 %v737
        %v773 = vpop.f32.mrf.mxu0
        %v774 = vadd.f32 %v700, %v773
        %v775 = vpop.f32.mrf.mxu0
        %v776 = vadd.f32 %v702, %v775
        %v777 = vpop.f32.mrf.mxu0
        %v778 = vpop.f32.mrf.mxu0
        %779 = vdwg.mxu0
        %780 = vrot.lane.b32.xlu0 %v377, 113
        %v781 = vpop.permute.xlu0 %780
        %782 = vrot.lane.b32.xlu0 %v379, 113
        %v783 = vpop.permute.xlu0 %782
        %784 = vrot.lane.b32.xlu0 %v378, 113
        %v785 = vpop.permute.xlu0 %784
        %786 = vrot.lane.b32.xlu0 %v380, 113
        %v787 = vpop.permute.xlu0 %786
        %vm788 = vcmp.lt.s32.totalorder %v390, 113
        %v789 = vsel %vm788, %v781, %v785
        %v790 = vsel %vm788, %v783, %v787
        %v791 = vsel %vm788, %v785, %v781
        %v792 = vsel %vm788, %v787, %v783
        %s793 = scalar_lea.vmem [#allocation6], 6
        %v794 = vld [vmem:[%s793] ss:$8 sm:$0x3]
        %v796 = vlaneseq
        %v797 = vshrl.u32 %v796, 7
        %v798 = vsub.s32 0, %v797
        %v799 = vrot.slane %v794, %v798
        %v800 = vlaneseq
        %v801 = vshrl.u32 %v800, 7
        %v802 = vsub.s32 1, %v801
        %v803 = vrot.slane %v794, %v802
        %v806 = vmul.f32 %v789, %v799
        %v807 = vmul.f32 %v791, %v803
        %v808 = vmul.f32 %v790, %v799
        %v809 = vmul.f32 %v792, %v803
        %v810 = vpack.c.bf16 %v808, %v806
        %v811 = vpack.c.bf16 %v809, %v807
        %v814 = vunpack.c.l.b16 %v810
        %v815 = vunpack.c.l.b16 %v811
        %v816 = vunpack.c.h.b16 %v810
        %v817 = vunpack.c.h.b16 %v811
        %v818 = vpack.c.b16 %v815, %v814
        %v819 = vpack.c.b16 %v817, %v816
        %822 = vst [vmem:[#allocation2] sm:$0xff] %v818
        %823 = vst [vmem:[#allocation2 + $0x8] sm:$0xff] %v819
        %824 = vrot.lane.b32.xlu0 %v377, 112
        %v825 = vpop.permute.xlu0 %824
        %826 = vrot.lane.b32.xlu0 %v379, 112
        %v827 = vpop.permute.xlu0 %826
        %828 = vrot.lane.b32.xlu0 %v378, 112
        %v829 = vpop.permute.xlu0 %828
        %830 = vrot.lane.b32.xlu0 %v380, 112
        %v831 = vpop.permute.xlu0 %830
        %vm832 = vcmp.lt.s32.totalorder %v390, 112
        %v833 = vsel %vm832, %v825, %v829
        %v834 = vsel %vm832, %v827, %v831
        %v835 = vsel %vm832, %v829, %v825
        %v836 = vsel %vm832, %v831, %v827
        %s837 = scalar_lea.vmem [#allocation6], 7
        %v838 = vld [vmem:[%s837] ss:$8 sm:$0x3]
        %v840 = vlaneseq
        %v841 = vshrl.u32 %v840, 7
        %v842 = vsub.s32 0, %v841
        %v843 = vrot.slane %v838, %v842
        %v844 = vlaneseq
        %v845 = vshrl.u32 %v844, 7
        %v846 = vsub.s32 1, %v845
        %v847 = vrot.slane %v838, %v846
        %v850 = vmul.f32 %v833, %v843
        %v851 = vmul.f32 %v835, %v847
        %v852 = vmul.f32 %v834, %v843
        %v853 = vmul.f32 %v836, %v847
        %v854 = vpack.c.bf16 %v852, %v850
        %v855 = vpack.c.bf16 %v853, %v851
        %v858 = vunpack.c.l.b16 %v854
        %v859 = vunpack.c.l.b16 %v855
        %v860 = vunpack.c.h.b16 %v854
        %v861 = vunpack.c.h.b16 %v855
        %v862 = vpack.c.b16 %v859, %v858
        %v863 = vpack.c.b16 %v861, %v860
        %866 = vst [vmem:[#allocation2 + $0x10] sm:$0xff] %v862
        %867 = vst [vmem:[#allocation2 + $0x18] sm:$0xff] %v863
        %868 = vrot.lane.b32.xlu0 %v377, 111
        %v869 = vpop.permute.xlu0 %868
        %870 = vrot.lane.b32.xlu0 %v379, 111
        %v871 = vpop.permute.xlu0 %870
        %872 = vrot.lane.b32.xlu0 %v378, 111
        %v873 = vpop.permute.xlu0 %872
        %874 = vrot.lane.b32.xlu0 %v380, 111
        %v875 = vpop.permute.xlu0 %874
        %vm876 = vcmp.lt.s32.totalorder %v390, 111
        %v877 = vsel %vm876, %v869, %v873
        %v878 = vsel %vm876, %v871, %v875
        %v879 = vsel %vm876, %v873, %v869
        %v880 = vsel %vm876, %v875, %v871
        %s881 = scalar_lea.vmem [#allocation6], 16
        %v882 = vld [vmem:[%s881] ss:$8 sm:$0x3]
        %v884 = vlaneseq
        %v885 = vshrl.u32 %v884, 7
        %v886 = vsub.s32 0, %v885
        %v887 = vrot.slane %v882, %v886
        %v888 = vlaneseq
        %v889 = vshrl.u32 %v888, 7
        %v890 = vsub.s32 1, %v889
        %v891 = vrot.slane %v882, %v890
        %v894 = vmul.f32 %v877, %v887
        %v895 = vmul.f32 %v879, %v891
        %v896 = vmul.f32 %v878, %v887
        %v897 = vmul.f32 %v880, %v891
        %v898 = vpack.c.bf16 %v896, %v894
        %v899 = vpack.c.bf16 %v897, %v895
        %v902 = vunpack.c.l.b16 %v898
        %v903 = vunpack.c.l.b16 %v899
        %v904 = vunpack.c.h.b16 %v898
        %v905 = vunpack.c.h.b16 %v899
        %v906 = vpack.c.b16 %v903, %v902
        %v907 = vpack.c.b16 %v905, %v904
        %910 = vst [vmem:[#allocation2 + $0x20] sm:$0xff] %v906
        %911 = vst [vmem:[#allocation2 + $0x28] sm:$0xff] %v907
        %s912 = scalar_lea.vmem [#allocation3], 8
        %v913 = vld [vmem:[%s912] sm:$0xf]
        %v914 = vld [vmem:[#allocation2] sm:$0xff]
        %v915 = vld [vmem:[#allocation2 + $0x8] sm:$0xff]
        %v916 = vld [vmem:[#allocation2 + $0x10] sm:$0xff]
        %v917 = vld [vmem:[#allocation2 + $0x18] sm:$0xff]
        %v918 = vld [vmem:[#allocation2 + $0x20] sm:$0xff]
        %v919 = vld [vmem:[#allocation2 + $0x28] sm:$0xff]
        %v926 = vunpack.c.l.b16 %v914
        %v927 = vunpack.c.h.b16 %v914
        %v928 = vunpack.c.l.b16 %v915
        %v929 = vunpack.c.h.b16 %v915
        %v930 = vunpack.c.l.b16 %v916
        %v931 = vunpack.c.h.b16 %v916
        %v932 = vunpack.c.l.b16 %v917
        %v933 = vunpack.c.h.b16 %v917
        %v934 = vunpack.c.l.b16 %v918
        %v935 = vunpack.c.h.b16 %v918
        %v936 = vunpack.c.l.b16 %v919
        %v937 = vunpack.c.h.b16 %v919
        %v938 = vpack.c.b16 %v928, %v926
        %v939 = vpack.c.b16 %v929, %v927
        %v940 = vpack.c.b16 %v932, %v930
        %v941 = vpack.c.b16 %v933, %v931
        %v942 = vpack.c.b16 %v936, %v934
        %v943 = vpack.c.b16 %v937, %v935
        %v951 = vsel %vm661, %v913, 0
        %953 = vmatprep.subr.bf16.mxu0 0
        %954 = vmatpush1.bf16.msra.mxu0 0
        %955 = vmatprep.subr.bf16.mxu0 0
        %956 = vmatpush1.bf16.msra.mxu0 0
        %957 = vmatprep.subr.bf16.mxu0 0
        %958 = vmatpush1.bf16.msra.mxu0 0
        %959 = vmatprep.subr.bf16.mxu0 0
        %960 = vmatpush1.bf16.msra.mxu0 0
        %961 = vmatprep.subr.bf16.mxu0 0
        %962 = vmatpush1.bf16.msra.mxu0 0
        %963 = vmatprep.subr.bf16.mxu0 %v943
        %964 = vmatpush1.bf16.msra.mxu0 %v942
        %965 = vmatprep.subr.bf16.mxu0 %v941
        %966 = vmatpush1.bf16.msra.mxu0 %v940
        %967 = vmatprep.subr.bf16.mxu0 %v939
        %968 = vmatpush1.bf16.msra.mxu0 %v938
        %969 = vmatprep.subr.bf16.mxu0 0
        %970 = vmatpush2.bf16.msra.mxu0 0
        %971 = vmatprep.subr.bf16.mxu0 0
        %972 = vmatpush2.bf16.msra.mxu0 0
        %973 = vmatprep.subr.bf16.mxu0 0
        %974 = vmatpush2.bf16.msra.mxu0 0
        %975 = vmatprep.subr.bf16.mxu0 0
        %976 = vmatpush2.bf16.msra.mxu0 0
        %977 = vmatprep.subr.bf16.mxu0 0
        %978 = vmatpush2.bf16.msra.mxu0 0
        %979 = vmatprep.subr.bf16.mxu0 0
        %980 = vmatpush2.bf16.msra.mxu0 0
        %981 = vmatprep.subr.bf16.mxu0 0
        %982 = vmatpush2.bf16.msra.mxu0 0
        %983 = vmatprep.subr.bf16.mxu0 0
        %984 = vmatpush2.bf16.msra.mxu0 0
        %985 = vmatprep.mubr.bf16.mxu0 0
        %986 = vmatmul.mubr.bf16.gmra.mxu0 %v951
        %v987 = vpop.f32.mrf.mxu0
        %v988 = vadd.f32 0.0, %v987
        %v989 = vpop.f32.mrf.mxu0
        %v990 = vadd.f32 0.0, %v989
        %v991 = vpop.f32.mrf.mxu0
        %v992 = vpop.f32.mrf.mxu0
        %993 = vdwg.mxu0
        %v994 = vadd.f32 %v774, %v988
        %v995 = vadd.f32 %v776, %v990
        %v996 = vld [vmem:[%s4] sm:$0xff]
        %998 = vset.pattern.permute.xlu0 0
        %999 = vperm.xlu0 %998, %v996
        %v1000 = vpop.permute.xlu0 %999
        %v1002 = vadd.f32 %v994, %v1000
        %v1003 = vadd.f32 %v995, %v1000
        %v1004 = vmul.f32 %v1002, 0.5
        %v1005 = vmul.f32 %v1003, 0.5
        %v1006 = vtanh.pop %v1004
        %v1007 = vtanh.pop %v1005
        %v1008 = vadd.f32 %v1006, 1.0
        %v1009 = vadd.f32 %v1007, 1.0
        %v1010 = vmul.f32 %v1008, 0.5
        %v1011 = vmul.f32 %v1009, 0.5
        %v1012 = vmul.f32 %v1002, %v1010
        %v1013 = vmul.f32 %v1003, %v1011
        %v1014 = vld [vmem:[%s280] sm:$0xff]
        %v1015 = vld [vmem:[%s280 + $0x8] sm:$0xff]
        %v1016 = vadd.f32 %v1012, %v1014
        %v1017 = vadd.f32 %v1013, %v1015
        %1018 = vst [vmem:[%s275] sm:$0xff] %v1016
        %1019 = vst [vmem:[%s275 + $0x8] sm:$0xff] %v1017
        %s1020 = sand.u32 %s161, 1
        %s1021 = scalar_lea.sflag [#allocation5], %s1020
        %s1022 = sand.u32 %s161, 1
        %s1023 = smul.addr %s1022, 16
        %s1024 = scalar_lea.vmem [#allocation8], %s1023
        // Predicated region
        $region53: #{tpu_custom_call.1} parent=43 // pred_check
          %p1025 = pneg %p171
        $region54: #{tpu_custom_call.1} parent=43 // pred_check_branch
          %1027 = sbr.rel (%p1025) target = $region56
        $region55: #{tpu_custom_call.1} parent=43 // pred_region
          %s1028 = smul.u32 2, %s22
          %s1030 = ssub.s32 256, 256
          %1031 = vsyncadd %s1021, %s1030
          %s1032 = smul.addr %s1028, 128
          %s1033 = scalar_lea.hbm %s6, %s1032
          %s1035 = sshll.u32 %s1024, 4
          %s1036 = int_to_ptr.vmem [resolvable:$true] %s1035
          %1038 = dma.vmem_to_hbm [thread:$0]  %s1036, 256, %s1033, %s1021
        $region56: #{tpu_custom_call.1} parent=43 // pred_fallthru
          _
      $region44: #{tpu_custom_call.1} parent=5 // pred_fallthru
        _
      %p1039 = scmp.le.s32.totalorder 2, %s17
      // Predicated region
      $region57: #{tpu_custom_call.1} parent=5 // pred_check
        %p1040 = pneg %p1039
      $region58: #{tpu_custom_call.1} parent=5 // pred_check_branch
        %1042 = sbr.rel (%p1040) target = $region60
      $region59: #{tpu_custom_call.1} parent=5 // pred_region
        %s1043 = ssub.s32 %s17, 2
        // Predicated region
        $region61: #{tpu_custom_call.1} parent=59 // pred_check
          %p1044 = pneg %p177
        $region62: #{tpu_custom_call.1} parent=59 // pred_check_branch
          %1046 = sbr.rel (%p1044) target = $region64
        $region63: #{tpu_custom_call.1} parent=59 // pred_region
          %s1047 = sand.u32 %s162, 1
          %s1048 = scalar_lea.sflag [#allocation5], %s1047
          %s1049 = sand.u32 %s162, 1
          %s1050 = smul.addr %s1049, 16
          %s1051 = scalar_lea.vmem [#allocation8], %s1050
          %1052 = dma.done %s1048, 256
        $region64: #{tpu_custom_call.1} parent=59 // pred_fallthru
          _
      $region60: #{tpu_custom_call.1} parent=5 // pred_fallthru
        _
    $region6: #{tpu_custom_call.1} parent=1 // loop_footer
      %s21 = sadd.s32 1, %s17
    $region7: #{tpu_custom_call.1} parent=1 // loop_footer_branch
      %16 = sbr.rel target = $region3
    $region8: #{tpu_custom_call.1} parent=1 // loop_exit
      _
    %1053 = vsyncpa [#allocation4], 1
    %s1054 = scalar_lea.sflag [#allocation4], 1
    %1055 = vsyncpa %s1054, 1
    %1056 = vsyncpa [#allocation7], 1
    %1057 = vsyncpa [#allocation5], 1
    %s1058 = scalar_lea.sflag [#allocation5], 1
    %1059 = vsyncpa %s1058, 1

</llo_original>
